<compile_context>
chip_gen: v6e
topology: v6e:2x2x1
jax: 0.10.0
libtpu: 0.0.40
codegen_flags: <defaults>
</compile_context>

<pallas_src>
import jax
import jax.numpy as jnp
from jax.experimental import pallas as pl
from jax.experimental.pallas import tpu as pltpu


# Static problem sizes implied by the module: param (3,4), Linear(4 -> 5).
M, K, N = 3, 4, 5
SLAB_ROWS, SLAB_COLS = 8, 128  # one f32 vreg tile; everything fits inside


def _mymodule_kernel(x_ref, slab_ref, o_ref):
    # slab layout (static row offsets):
    #   rows [0, K)      cols [0, N) : W^T            (K, N)
    #   rows [K, K + M)  cols [0, N) : fused bias B   (M, N)  = param @ W^T + b
    x = x_ref[...]                                   # (M, K) f32
    w_t = slab_ref[0:K, 0:N]                         # (K, N) f32, static slice
    b_fused = slab_ref[K:K + M, 0:N]                 # (M, N) f32, static slice

    # Linear as K unrolled VPU broadcast-FMAs (K is a small static int),
    # skipping the MXU entirely; start the accumulator from the fused bias.
    acc = b_fused
    for k in range(K):                               # unrolled at trace time
        acc = acc + x[:, k:k + 1] * w_t[k, :]        # (M,1)*(N,) -> (M,N)

    # clamp(min=0.0, max=1.0)
    o_ref[...] = jnp.clip(acc, 0.0, 1.0).astype(o_ref.dtype)


def pack_params(param, weight, bias):
    """One-time parameter setup (NOT on the per-forward path).

    Folds `param` into the bias and packs W^T + fused bias into a single
    lane-aligned (8, 128) f32 slab so the kernel needs one parameter DMA.
    """
    w_t = weight.T.astype(jnp.float32)               # (K, N)
    b_fused = param.astype(jnp.float32) @ w_t + bias.astype(jnp.float32)  # (M, N)
    slab = jnp.zeros((SLAB_ROWS, SLAB_COLS), jnp.float32)
    slab = slab.at[0:K, 0:N].set(w_t)
    slab = slab.at[K:K + M, 0:N].set(b_fused)
    return slab


def mymodule_forward(x, params_slab):
    """x: (M, K) f32, params_slab: (8, 128) f32 from pack_params()."""
    m, k = x.shape
    assert (m, k) == (M, K), "param is fixed at (3, 4); x must match"

    vmem = pl.BlockSpec(memory_space=pltpu.MemorySpace.VMEM)
    cost = pl.CostEstimate(
        flops=2 * M * K * N + 2 * M * N,             # matmul + clamp, ~150 FLOPs
        transcendentals=0,
        bytes_accessed=(M * K + SLAB_ROWS * SLAB_COLS + M * N) * 4,
    )
    return pl.pallas_call(
        _mymodule_kernel,
        out_shape=jax.ShapeDtypeStruct((M, N), x.dtype),
        in_specs=[vmem, vmem],                       # whole (tiny) arrays in VMEM
        out_specs=vmem,
        cost_estimate=cost,
    )(x, params_slab)


if __name__ == "__main__":
    key = jax.random.PRNGKey(0)
    k_param, k_w, k_b, k_x = jax.random.split(key, 4)

    # Deterministic parameter init mirroring torch semantics:
    #   self.param = torch.rand(3, 4)          -> U[0, 1)
    #   nn.Linear(4, 5): weight, bias ~ U[-1/sqrt(4), 1/sqrt(4)]
    param = jax.random.uniform(k_param, (M, K), dtype=jnp.float32)
    bound = 1.0 / (K ** 0.5)
    weight = jax.random.uniform(k_w, (N, K), dtype=jnp.float32,
                                minval=-bound, maxval=bound)
    bias = jax.random.uniform(k_b, (N,), dtype=jnp.float32,
                              minval=-bound, maxval=bound)

    # Example input: shape (3, 4) so x + param matches torch broadcasting.
    x = jax.random.normal(k_x, (M, K), dtype=jnp.float32)

    # One-time setup (fold + pack), then the forward call.
    params_slab = jax.block_until_ready(pack_params(param, weight, bias))
    out = mymodule_forward(x, params_slab)
    out = jax.block_until_ready(out)

    # Pure-JAX reference check (original, unfolded math).
    ref = jnp.clip((x + param) @ weight.T + bias, 0.0, 1.0)
    assert out.shape == (M, N)
    assert jnp.allclose(out, ref, atol=1e-5, rtol=1e-5)

    print("KERNEL_OK")
</pallas_src>

<mosaic_0001>
module attributes {stable_mosaic.version = 11 : i64} {
  func.func @_mymodule_kernel(%arg0: memref<3x4xf32, #tpu.memory_space<vmem>>, %arg1: memref<8x128xf32, #tpu.memory_space<vmem>>, %arg2: memref<3x5xf32, #tpu.memory_space<vmem>>) attributes {dimension_semantics = [], scalar_prefetch = 0 : i64, scratch_operands = 0 : i64, tpu.core_type = #tpu.core_type<tc>} {
    %c0 = arith.constant 0 : index
    %c0_0 = arith.constant 0 : index
    %0 = vector.load %arg0[%c0, %c0_0] : memref<3x4xf32, #tpu.memory_space<vmem>>, vector<3x4xf32>
    %c0_1 = arith.constant 0 : index
    %c0_2 = arith.constant 0 : index
    %1 = vector.load %arg1[%c0_1, %c0_2] : memref<8x128xf32, #tpu.memory_space<vmem>>, vector<4x5xf32>
    %c4 = arith.constant 4 : index
    %c0_3 = arith.constant 0 : index
    %2 = vector.load %arg1[%c4, %c0_3] : memref<8x128xf32, #tpu.memory_space<vmem>>, vector<3x5xf32>
    %3 = vector.extract_strided_slice %0 {offsets = [0, 0], sizes = [3, 1], strides = [1, 1]} : vector<3x4xf32> to vector<3x1xf32>
    %4 = vector.extract_strided_slice %1 {offsets = [0, 0], sizes = [1, 5], strides = [1, 1]} : vector<4x5xf32> to vector<1x5xf32>
    %5 = vector.shape_cast %4 : vector<1x5xf32> to vector<5xf32>
    %6 = vector.shape_cast %5 : vector<5xf32> to vector<1x5xf32>
    %7 = vector.broadcast %3 : vector<3x1xf32> to vector<3x5xf32>
    %8 = vector.broadcast %6 : vector<1x5xf32> to vector<3x5xf32>
    %9 = arith.mulf %7, %8 : vector<3x5xf32>
    %10 = arith.addf %2, %9 : vector<3x5xf32>
    %11 = vector.extract_strided_slice %0 {offsets = [0, 1], sizes = [3, 1], strides = [1, 1]} : vector<3x4xf32> to vector<3x1xf32>
    %12 = vector.extract_strided_slice %1 {offsets = [1, 0], sizes = [1, 5], strides = [1, 1]} : vector<4x5xf32> to vector<1x5xf32>
    %13 = vector.shape_cast %12 : vector<1x5xf32> to vector<5xf32>
    %14 = vector.shape_cast %13 : vector<5xf32> to vector<1x5xf32>
    %15 = vector.broadcast %11 : vector<3x1xf32> to vector<3x5xf32>
    %16 = vector.broadcast %14 : vector<1x5xf32> to vector<3x5xf32>
    %17 = arith.mulf %15, %16 : vector<3x5xf32>
    %18 = arith.addf %10, %17 : vector<3x5xf32>
    %19 = vector.extract_strided_slice %0 {offsets = [0, 2], sizes = [3, 1], strides = [1, 1]} : vector<3x4xf32> to vector<3x1xf32>
    %20 = vector.extract_strided_slice %1 {offsets = [2, 0], sizes = [1, 5], strides = [1, 1]} : vector<4x5xf32> to vector<1x5xf32>
    %21 = vector.shape_cast %20 : vector<1x5xf32> to vector<5xf32>
    %22 = vector.shape_cast %21 : vector<5xf32> to vector<1x5xf32>
    %23 = vector.broadcast %19 : vector<3x1xf32> to vector<3x5xf32>
    %24 = vector.broadcast %22 : vector<1x5xf32> to vector<3x5xf32>
    %25 = arith.mulf %23, %24 : vector<3x5xf32>
    %26 = arith.addf %18, %25 : vector<3x5xf32>
    %27 = vector.extract_strided_slice %0 {offsets = [0, 3], sizes = [3, 1], strides = [1, 1]} : vector<3x4xf32> to vector<3x1xf32>
    %28 = vector.extract_strided_slice %1 {offsets = [3, 0], sizes = [1, 5], strides = [1, 1]} : vector<4x5xf32> to vector<1x5xf32>
    %29 = vector.shape_cast %28 : vector<1x5xf32> to vector<5xf32>
    %30 = vector.shape_cast %29 : vector<5xf32> to vector<1x5xf32>
    %31 = vector.broadcast %27 : vector<3x1xf32> to vector<3x5xf32>
    %32 = vector.broadcast %30 : vector<1x5xf32> to vector<3x5xf32>
    %33 = arith.mulf %31, %32 : vector<3x5xf32>
    %34 = arith.addf %26, %33 : vector<3x5xf32>
    %cst = arith.constant 0.000000e+00 : f32
    %cst_4 = arith.constant 1.000000e+00 : f32
    %35 = vector.broadcast %cst : f32 to vector<3x5xf32>
    %36 = arith.maximumf %35, %34 : vector<3x5xf32>
    %37 = vector.broadcast %cst_4 : f32 to vector<3x5xf32>
    %38 = arith.minimumf %37, %36 : vector<3x5xf32>
    %c0_5 = arith.constant 0 : index
    %c0_6 = arith.constant 0 : index
    %39 = vector.load %arg2[%c0_5, %c0_6] : memref<3x5xf32, #tpu.memory_space<vmem>>, vector<3x5xf32>
    tpu.vector_store %arg2[%c0_5, %c0_6], %38 {strides = array<i32>} : memref<3x5xf32, #tpu.memory_space<vmem>>, vector<3x5xf32>,
    return
  }
}

</mosaic_0001>

<llo_original>
// kernel: tpu_custom_call.1
$region0: #{tpu_custom_call.1}
  #allocation0 [shape = 'u32[]', space=smem, size = 0x4, offset = 0x4, fixed_abs, tag = 'smem constant byte address 0x4 - core index']
  #allocation1 [shape = 'u32[144,128]{1,0:T(1,128)}', space=vmem, size = 0x12000, scoped, tag = 'internal scratch']
  %s0 = inlined_call_operand.hbm [shape: f32[3,4], index: 0, kind: input, shape index: {}]
  %s1 = inlined_call_operand.hbm [shape: f32[8,128], index: 1, kind: input, shape index: {}]
  %s2 = inlined_call_operand.hbm [shape: f32[3,5], index: 2, kind: output, shape index: {}]
  %s3 = sld [smem:[#allocation0]]
  $region26: #{tpu_custom_call.1} parent=0
    _
  %s5 = ssub.s32 1, %s3
  %s6 = scalar_select 0, %s5, %s3
  $region1: #{tpu_custom_call.1} parent=0
    #allocation2 [shape = 'u8[2048]{0}', space=vmem, size = 0x800, scoped, tag = 'input window, operand 0, single buffered']
    #allocation3 [shape = 's32[1]{0}', space=sflag, size = 0x4, scoped, tag = 'scoped memory for tpu_custom_call.1']
    #allocation4 [shape = 's32[1]{0}', space=sflag, size = 0x4, scoped, tag = 'scoped memory for tpu_custom_call.1']
    #allocation5 [shape = 'u8[4096]{0}', space=vmem, size = 0x1000, scoped, tag = 'input window, operand 1, single buffered']
    #allocation6 [shape = 's32[1]{0}', space=sflag, size = 0x4, scoped, tag = 'scoped memory for tpu_custom_call.1']
    #allocation7 [shape = 'u8[2048]{0}', space=vmem, size = 0x800, scoped, tag = 'output window, operand 0, single buffered']
    %7 = vsyncpa [#allocation3], 0
    %8 = vsyncpa [#allocation6], 0
    %9 = vsyncpa [#allocation4], 0
    // Predicated region
    $region2: #{tpu_custom_call.1} parent=1 // pred_check
      _
    $region3: #{tpu_custom_call.1} parent=1 // pred_check_branch
      %11 = sbr.rel (0) target = $region5
    $region4: #{tpu_custom_call.1} parent=1 // pred_region
      %s13 = ssub.s32 64, 64
      %14 = vsyncadd [#allocation3], %s13
      %s16 = sshll.u32 [#allocation2], 4
      %s17 = int_to_ptr.vmem [resolvable:$true] %s16
      %19 = dma.hbm_to_vmem [thread:$0]  %s0, 64, %s17, [#allocation3]
    $region5: #{tpu_custom_call.1} parent=1 // pred_fallthru
      _
    // Predicated region
    $region6: #{tpu_custom_call.1} parent=1 // pred_check
      _
    $region7: #{tpu_custom_call.1} parent=1 // pred_check_branch
      %21 = sbr.rel (0) target = $region9
    $region8: #{tpu_custom_call.1} parent=1 // pred_region
      %s23 = ssub.s32 128, 128
      %24 = vsyncadd [#allocation6], %s23
      %s26 = sshll.u32 [#allocation5], 4
      %s27 = int_to_ptr.vmem [resolvable:$true] %s26
      %29 = dma.hbm_to_vmem [thread:$0]  %s1, 128, %s27, [#allocation6]
    $region9: #{tpu_custom_call.1} parent=1 // pred_fallthru
      _
    // Predicated region
    $region10: #{tpu_custom_call.1} parent=1 // pred_check
      _
    $region11: #{tpu_custom_call.1} parent=1 // pred_check_branch
      %31 = sbr.rel (0) target = $region13
    $region12: #{tpu_custom_call.1} parent=1 // pred_region
      %32 = dma.done [#allocation3], 64
    $region13: #{tpu_custom_call.1} parent=1 // pred_fallthru
      _
    // Predicated region
    $region14: #{tpu_custom_call.1} parent=1 // pred_check
      _
    $region15: #{tpu_custom_call.1} parent=1 // pred_check_branch
      %34 = sbr.rel (0) target = $region17
    $region16: #{tpu_custom_call.1} parent=1 // pred_region
      %35 = dma.done [#allocation6], 128
    $region17: #{tpu_custom_call.1} parent=1 // pred_fallthru
      _
    %v36 = vld [vmem:[#allocation2] sm:$0x7]
    %v37 = vld [vmem:[#allocation5] sm:$0xf]
    %v38 = vld [vmem:[#allocation5 + $0x4] sm:$0x7]
    %40 = vset.pattern.permute.xlu0 0
    %41 = vperm.xlu0 %40, %v36
    %v42 = vpop.permute.xlu0 %41
    %v44 = vlaneseq
    %v45 = vshrl.u32 %v44, 7
    %v46 = vsub.s32 0, %v45
    %v47 = vrot.slane %v37, %v46
    %v48 = vmul.f32 %v42, %v47
    %v49 = vadd.f32 %v38, %v48
    %50 = vset.pattern.permute.xlu0 1
    %51 = vperm.xlu0 %50, %v36
    %v52 = vpop.permute.xlu0 %51
    %v54 = vlaneseq
    %v55 = vshrl.u32 %v54, 7
    %v56 = vsub.s32 1, %v55
    %v57 = vrot.slane %v37, %v56
    %v58 = vmul.f32 %v52, %v57
    %v59 = vadd.f32 %v49, %v58
    %60 = vset.pattern.permute.xlu0 2
    %61 = vperm.xlu0 %60, %v36
    %v62 = vpop.permute.xlu0 %61
    %v64 = vlaneseq
    %v65 = vshrl.u32 %v64, 7
    %v66 = vsub.s32 2, %v65
    %v67 = vrot.slane %v37, %v66
    %v68 = vmul.f32 %v62, %v67
    %v69 = vadd.f32 %v59, %v68
    %70 = vset.pattern.permute.xlu0 3
    %71 = vperm.xlu0 %70, %v36
    %v72 = vpop.permute.xlu0 %71
    %v74 = vlaneseq
    %v75 = vshrl.u32 %v74, 7
    %v76 = vsub.s32 3, %v75
    %v77 = vrot.slane %v37, %v76
    %v78 = vmul.f32 %v72, %v77
    %v79 = vadd.f32 %v69, %v78
    %v80 = vmax.f32 %v79, 0.0
    %v81 = vmin.f32 %v80, 1.0
    %vm82 = vcmask 34816
    %83 = vst.msk [vmem:[#allocation7] sm:$0x7] %vm82, %v81
    // Predicated region
    $region18: #{tpu_custom_call.1} parent=1 // pred_check
      _
    $region19: #{tpu_custom_call.1} parent=1 // pred_check_branch
      %85 = sbr.rel (0) target = $region21
    $region20: #{tpu_custom_call.1} parent=1 // pred_region
      %s87 = ssub.s32 64, 64
      %88 = vsyncadd [#allocation4], %s87
      %s90 = sshll.u32 [#allocation7], 4
      %s91 = int_to_ptr.vmem [resolvable:$true] %s90
      %93 = dma.vmem_to_hbm [thread:$0]  %s91, 64, %s2, [#allocation4]
    $region21: #{tpu_custom_call.1} parent=1 // pred_fallthru
      _
    // Predicated region
    $region22: #{tpu_custom_call.1} parent=1 // pred_check
      _
    $region23: #{tpu_custom_call.1} parent=1 // pred_check_branch
      %95 = sbr.rel (0) target = $region25
    $region24: #{tpu_custom_call.1} parent=1 // pred_region
      %96 = dma.done [#allocation4], 64
    $region25: #{tpu_custom_call.1} parent=1 // pred_fallthru
      _
    %97 = vsyncpa [#allocation3], 1
    %98 = vsyncpa [#allocation6], 1
    %99 = vsyncpa [#allocation4], 1

</llo_original>
